<compile_context>
chip_gen: v6e
topology: v6e:2x2x1
jax: 0.10.0
libtpu: 0.0.40
codegen_flags: <defaults>
</compile_context>

<pallas_src>
import jax
import jax.numpy as jnp
from jax import lax
from jax.experimental import pallas as pl
from jax.experimental.pallas import tpu as pltpu

LN_EPS = 1e-5           # PyTorch nn.LayerNorm default eps
BLOCK_ROWS_MAX = 1024   # rows per grid step (sublane-aligned, VMEM-friendly)


def _add_norm_kernel(*refs):
    """refs = (x1_ref[, x2_ref[, x3_ref]], gamma_ref, beta_ref, out_ref).

    Each x ref / out ref is a (block_rows, H) VMEM tile; gamma/beta are (1, H).
    """
    *x_refs, g_ref, b_ref, o_ref = refs

    # Elementwise sum of the (2 or 3) inputs, accumulated in f32.
    acc = x_refs[0][...].astype(jnp.float32)
    for r in x_refs[1:]:
        acc = acc + r[...].astype(jnp.float32)

    # LayerNorm over the last (hidden) dimension, PyTorch semantics
    # (biased variance, eps inside the sqrt, then affine gamma/beta).
    mean = jnp.mean(acc, axis=-1, keepdims=True)
    centered = acc - mean
    var = jnp.mean(centered * centered, axis=-1, keepdims=True)
    inv = lax.rsqrt(var + LN_EPS)                      # EUP, off the VALU path
    y = centered * inv * g_ref[...] + b_ref[...]
    o_ref[...] = y.astype(o_ref.dtype)


def add_and_norm(x1, x2, x3=None, *, gamma, beta):
    """Pallas AddAndNorm forward.  x*: (..., H); gamma/beta: (H,)."""
    assert x1.shape == x2.shape, "Input tensor sizes must match."
    if x3 is not None:
        assert x1.shape == x3.shape, "Input tensor sizes must match."

    inputs = [x1, x2] + ([x3] if x3 is not None else [])
    orig_shape = x1.shape
    H = orig_shape[-1]
    assert gamma.shape[-1] == H and beta.shape[-1] == H

    rows = 1
    for d in orig_shape[:-1]:
        rows *= d
    xs = [x.reshape(rows, H) for x in inputs]

    # Row tiling: sublane-align (multiple of 8); one big tile if it fits,
    # otherwise BLOCK_ROWS_MAX-row tiles over a parallel grid.
    rows_p = pl.cdiv(rows, 8) * 8
    if rows_p <= BLOCK_ROWS_MAX:
        block_rows = rows_p
    else:
        block_rows = BLOCK_ROWS_MAX
        rows_p = pl.cdiv(rows, block_rows) * block_rows
    if rows_p != rows:
        pad = rows_p - rows
        xs = [jnp.pad(x, ((0, pad), (0, 0))) for x in xs]

    g2 = gamma.reshape(1, H).astype(jnp.float32)
    b2 = beta.reshape(1, H).astype(jnp.float32)

    row_spec = pl.BlockSpec((block_rows, H), lambda i: (i, 0))
    vec_spec = pl.BlockSpec((1, H), lambda i: (0, 0))

    out = pl.pallas_call(
        _add_norm_kernel,
        out_shape=jax.ShapeDtypeStruct((rows_p, H), x1.dtype),
        grid_spec=pltpu.PrefetchScalarGridSpec(
            num_scalar_prefetch=0,
            grid=(rows_p // block_rows,),
            in_specs=[row_spec] * len(xs) + [vec_spec, vec_spec],
            out_specs=row_spec,
        ),
        compiler_params=pltpu.CompilerParams(
            dimension_semantics=("parallel",)),
    )(*xs, g2, b2)

    return out[:rows].reshape(orig_shape)


def _reference(x1, x2, x3, gamma, beta):
    """Pure-JAX LayerNorm(add) reference matching PyTorch semantics."""
    x = x1 + x2
    if x3 is not None:
        x = x + x3
    mean = jnp.mean(x, axis=-1, keepdims=True)
    var = jnp.mean((x - mean) ** 2, axis=-1, keepdims=True)
    return (x - mean) / jnp.sqrt(var + LN_EPS) * gamma + beta


if __name__ == "__main__":
    key = jax.random.PRNGKey(0)
    k1, k2, k3, kg, kb = jax.random.split(key, 5)

    B, T, H = 2, 16, 128   # small shapes; H = hidden_layer_size (lane-dense)
    x1 = jax.random.normal(k1, (B, T, H), jnp.float32)
    x2 = jax.random.normal(k2, (B, T, H), jnp.float32)
    x3 = jax.random.normal(k3, (B, T, H), jnp.float32)
    gamma = jax.random.normal(kg, (H,), jnp.float32) * 0.1 + 1.0
    beta = jax.random.normal(kb, (H,), jnp.float32) * 0.1

    # Three-input path.
    out3 = jax.block_until_ready(add_and_norm(x1, x2, x3, gamma=gamma, beta=beta))
    ref3 = _reference(x1, x2, x3, gamma, beta)
    assert out3.shape == (B, T, H)
    assert jnp.allclose(out3, ref3, atol=1e-4, rtol=1e-4), "3-input mismatch"

    # Two-input path (x3=None).
    out2 = jax.block_until_ready(add_and_norm(x1, x2, gamma=gamma, beta=beta))
    ref2 = _reference(x1, x2, None, gamma, beta)
    assert out2.shape == (B, T, H)
    assert jnp.allclose(out2, ref2, atol=1e-4, rtol=1e-4), "2-input mismatch"

    print("KERNEL_OK")
</pallas_src>

<mosaic_0001>
module attributes {stable_mosaic.version = 11 : i64} {
  func.func @_add_norm_kernel(%arg0: i32, %arg1: memref<32x128xf32, #tpu.memory_space<vmem>>, %arg2: memref<32x128xf32, #tpu.memory_space<vmem>>, %arg3: memref<32x128xf32, #tpu.memory_space<vmem>>, %arg4: memref<1x128xf32, #tpu.memory_space<vmem>>, %arg5: memref<1x128xf32, #tpu.memory_space<vmem>>, %arg6: memref<32x128xf32, #tpu.memory_space<vmem>>) attributes {dimension_semantics = [#tpu.dimension_semantics<parallel>], iteration_bounds = array<i64: 1>, scalar_prefetch = 0 : i64, scratch_operands = 0 : i64, tpu.core_type = #tpu.core_type<tc>, window_params = [{transform_indices = @transform_0, window_bounds = array<i64: 32, 128>}, {transform_indices = @transform_1, window_bounds = array<i64: 32, 128>}, {transform_indices = @transform_2, window_bounds = array<i64: 32, 128>}, {pipeline_mode = #tpu.pipeline_mode<synchronous>, transform_indices = @transform_3, window_bounds = array<i64: 1, 128>}, {pipeline_mode = #tpu.pipeline_mode<synchronous>, transform_indices = @transform_4, window_bounds = array<i64: 1, 128>}, {transform_indices = @transform_5, window_bounds = array<i64: 32, 128>}]} {
    %c0 = arith.constant 0 : index
    %c0_0 = arith.constant 0 : index
    %0 = vector.load %arg1[%c0, %c0_0] : memref<32x128xf32, #tpu.memory_space<vmem>>, vector<32x128xf32>
    %c0_1 = arith.constant 0 : index
    %c0_2 = arith.constant 0 : index
    %1 = vector.load %arg2[%c0_1, %c0_2] : memref<32x128xf32, #tpu.memory_space<vmem>>, vector<32x128xf32>
    %2 = arith.addf %0, %1 : vector<32x128xf32>
    %c0_3 = arith.constant 0 : index
    %c0_4 = arith.constant 0 : index
    %3 = vector.load %arg3[%c0_3, %c0_4] : memref<32x128xf32, #tpu.memory_space<vmem>>, vector<32x128xf32>
    %4 = arith.addf %2, %3 : vector<32x128xf32>
    %cst = arith.constant dense<0.000000e+00> : vector<32xf32>
    %5 = vector.multi_reduction <add>, %4, %cst [1] : vector<32x128xf32> to vector<32xf32>
    %6 = vector.shape_cast %5 : vector<32xf32> to vector<32x1xf32>
    %cst_5 = arith.constant 1.280000e+02 : f32
    %7 = vector.broadcast %cst_5 : f32 to vector<32x1xf32>
    %8 = arith.divf %6, %7 : vector<32x1xf32>
    %9 = vector.broadcast %8 : vector<32x1xf32> to vector<32x128xf32>
    %10 = arith.subf %4, %9 : vector<32x128xf32>
    %11 = arith.mulf %10, %10 : vector<32x128xf32>
    %cst_6 = arith.constant dense<0.000000e+00> : vector<32xf32>
    %12 = vector.multi_reduction <add>, %11, %cst_6 [1] : vector<32x128xf32> to vector<32xf32>
    %13 = vector.shape_cast %12 : vector<32xf32> to vector<32x1xf32>
    %cst_7 = arith.constant 1.280000e+02 : f32
    %14 = vector.broadcast %cst_7 : f32 to vector<32x1xf32>
    %15 = arith.divf %13, %14 : vector<32x1xf32>
    %cst_8 = arith.constant 9.99999974E-6 : f32
    %16 = vector.broadcast %cst_8 : f32 to vector<32x1xf32>
    %17 = arith.addf %15, %16 : vector<32x1xf32>
    %18 = math.rsqrt %17 : vector<32x1xf32>
    %19 = vector.broadcast %18 : vector<32x1xf32> to vector<32x128xf32>
    %20 = arith.mulf %10, %19 : vector<32x128xf32>
    %c0_9 = arith.constant 0 : index
    %c0_10 = arith.constant 0 : index
    %21 = vector.load %arg4[%c0_9, %c0_10] : memref<1x128xf32, #tpu.memory_space<vmem>>, vector<1x128xf32>
    %22 = vector.broadcast %21 : vector<1x128xf32> to vector<32x128xf32>
    %23 = arith.mulf %20, %22 : vector<32x128xf32>
    %c0_11 = arith.constant 0 : index
    %c0_12 = arith.constant 0 : index
    %24 = vector.load %arg5[%c0_11, %c0_12] : memref<1x128xf32, #tpu.memory_space<vmem>>, vector<1x128xf32>
    %25 = vector.broadcast %24 : vector<1x128xf32> to vector<32x128xf32>
    %26 = arith.addf %23, %25 : vector<32x128xf32>
    %c0_13 = arith.constant 0 : index
    %c0_14 = arith.constant 0 : index
    %27 = vector.load %arg6[%c0_13, %c0_14] : memref<32x128xf32, #tpu.memory_space<vmem>>, vector<32x128xf32>
    tpu.vector_store %arg6[%c0_13, %c0_14], %26 {strides = array<i32>} : memref<32x128xf32, #tpu.memory_space<vmem>>, vector<32x128xf32>,
    return
  }
  func.func @transform_0(%arg0: i32) -> (i32, i32) {
    %c0_i32 = arith.constant 0 : i32
    %c0_i32_0 = arith.constant 0 : i32
    return %arg0, %c0_i32 : i32, i32
  }
  func.func @transform_1(%arg0: i32) -> (i32, i32) {
    %c0_i32 = arith.constant 0 : i32
    %c0_i32_0 = arith.constant 0 : i32
    return %arg0, %c0_i32 : i32, i32
  }
  func.func @transform_2(%arg0: i32) -> (i32, i32) {
    %c0_i32 = arith.constant 0 : i32
    %c0_i32_0 = arith.constant 0 : i32
    return %arg0, %c0_i32 : i32, i32
  }
  func.func @transform_3(%arg0: i32) -> (i32, i32) {
    %c0_i32 = arith.constant 0 : i32
    %c0_i32_0 = arith.constant 0 : i32
    %c0_i32_1 = arith.constant 0 : i32
    return %c0_i32, %c0_i32_0 : i32, i32
  }
  func.func @transform_4(%arg0: i32) -> (i32, i32) {
    %c0_i32 = arith.constant 0 : i32
    %c0_i32_0 = arith.constant 0 : i32
    %c0_i32_1 = arith.constant 0 : i32
    return %c0_i32, %c0_i32_0 : i32, i32
  }
  func.func @transform_5(%arg0: i32) -> (i32, i32) {
    %c0_i32 = arith.constant 0 : i32
    %c0_i32_0 = arith.constant 0 : i32
    return %arg0, %c0_i32 : i32, i32
  }
}

</mosaic_0001>

<llo_original>
// kernel: tpu_custom_call.1
$region0: #{tpu_custom_call.1}
  #allocation0 [shape = 'u32[]', space=smem, size = 0x4, offset = 0x4, fixed_abs, tag = 'smem constant byte address 0x4 - core index']
  #allocation1 [shape = 'u32[144,128]{1,0:T(1,128)}', space=vmem, size = 0x12000, scoped, tag = 'internal scratch']
  %s0 = inlined_call_operand.hbm [shape: f32[32,128], index: 0, kind: input, shape index: {}]
  %s1 = inlined_call_operand.hbm [shape: f32[32,128], index: 1, kind: input, shape index: {}]
  %s2 = inlined_call_operand.hbm [shape: f32[32,128], index: 2, kind: input, shape index: {}]
  %s3 = inlined_call_operand.vmem [shape: f32[1,128], index: 3, kind: input, shape index: {}]
  %s4 = inlined_call_operand.vmem [shape: f32[1,128], index: 4, kind: input, shape index: {}]
  %s5 = inlined_call_operand.hbm [shape: f32[32,128], index: 5, kind: output, shape index: {}]
  %s6 = sld [smem:[#allocation0]]
  $region42: #{tpu_custom_call.1} parent=0
    _
  %s8 = ssub.s32 1, %s6
  %s9 = scalar_select 0, %s8, %s6
  $region1: #{tpu_custom_call.1} parent=0
    #allocation2 [shape = 'u8[16384]{0}', space=vmem, size = 0x4000, scoped, tag = 'input window, operand 0, single buffered']
    #allocation3 [shape = 's32[1]{0}', space=sflag, size = 0x4, scoped, tag = 'scoped memory for tpu_custom_call.1']
    #allocation4 [shape = 's32[1]{0}', space=sflag, size = 0x4, scoped, tag = 'scoped memory for tpu_custom_call.1']
    #allocation5 [shape = 'u8[16384]{0}', space=vmem, size = 0x4000, scoped, tag = 'input window, operand 1, single buffered']
    #allocation6 [shape = 's32[1]{0}', space=sflag, size = 0x4, scoped, tag = 'scoped memory for tpu_custom_call.1']
    #allocation7 [shape = 'u8[16384]{0}', space=vmem, size = 0x4000, scoped, tag = 'input window, operand 2, single buffered']
    #allocation8 [shape = 'u8[16384]{0}', space=vmem, size = 0x4000, scoped, tag = 'output window, operand 0, single buffered']
    %10 = vsyncpa [#allocation3], 0
    %11 = vsyncpa [#allocation6], 0
    %12 = vsyncpa [#allocation4], 0
    // Predicated region
    $region2: #{tpu_custom_call.1} parent=1 // pred_check
      _
    $region3: #{tpu_custom_call.1} parent=1 // pred_check_branch
      %14 = sbr.rel (0) target = $region5
    $region4: #{tpu_custom_call.1} parent=1 // pred_region
      %s16 = ssub.s32 512, 512
      %17 = vsyncadd [#allocation3], %s16
      %s18 = sshll.u32 [#allocation2], 4
      %s19 = int_to_ptr.vmem [resolvable:$true] %s18
      %24 = dma.hbm_to_vmem [thread:$0]  %s0, 512, %s19, [#allocation3], 128, 128, 8
    $region5: #{tpu_custom_call.1} parent=1 // pred_fallthru
      _
    // Predicated region
    $region6: #{tpu_custom_call.1} parent=1 // pred_check
      _
    $region7: #{tpu_custom_call.1} parent=1 // pred_check_branch
      %26 = sbr.rel (0) target = $region9
    $region8: #{tpu_custom_call.1} parent=1 // pred_region
      %s28 = ssub.s32 512, 512
      %29 = vsyncadd [#allocation6], %s28
      %s30 = sshll.u32 [#allocation5], 4
      %s31 = int_to_ptr.vmem [resolvable:$true] %s30
      %36 = dma.hbm_to_vmem [thread:$0]  %s1, 512, %s31, [#allocation6], 128, 128, 8
    $region9: #{tpu_custom_call.1} parent=1 // pred_fallthru
      _
    // Predicated region
    $region10: #{tpu_custom_call.1} parent=1 // pred_check
      _
    $region11: #{tpu_custom_call.1} parent=1 // pred_check_branch
      %38 = sbr.rel (0) target = $region13
    $region12: #{tpu_custom_call.1} parent=1 // pred_region
      %s40 = ssub.s32 512, 512
      %41 = vsyncadd [#allocation6], %s40
      %s42 = sshll.u32 [#allocation7], 4
      %s43 = int_to_ptr.vmem [resolvable:$true] %s42
      %48 = dma.hbm_to_vmem [thread:$0]  %s2, 512, %s43, [#allocation6], 128, 128, 8
    $region13: #{tpu_custom_call.1} parent=1 // pred_fallthru
      _
    // Predicated region
    $region14: #{tpu_custom_call.1} parent=1 // pred_check
      _
    $region15: #{tpu_custom_call.1} parent=1 // pred_check_branch
      %50 = sbr.rel (0) target = $region17
    $region16: #{tpu_custom_call.1} parent=1 // pred_region
      _
    $region17: #{tpu_custom_call.1} parent=1 // pred_fallthru
      _
    // Predicated region
    $region18: #{tpu_custom_call.1} parent=1 // pred_check
      _
    $region19: #{tpu_custom_call.1} parent=1 // pred_check_branch
      %52 = sbr.rel (0) target = $region21
    $region20: #{tpu_custom_call.1} parent=1 // pred_region
      _
    $region21: #{tpu_custom_call.1} parent=1 // pred_fallthru
      _
    // Predicated region
    $region22: #{tpu_custom_call.1} parent=1 // pred_check
      _
    $region23: #{tpu_custom_call.1} parent=1 // pred_check_branch
      %54 = sbr.rel (0) target = $region25
    $region24: #{tpu_custom_call.1} parent=1 // pred_region
      %55 = dma.done [#allocation3], 512
    $region25: #{tpu_custom_call.1} parent=1 // pred_fallthru
      _
    // Predicated region
    $region26: #{tpu_custom_call.1} parent=1 // pred_check
      _
    $region27: #{tpu_custom_call.1} parent=1 // pred_check_branch
      %57 = sbr.rel (0) target = $region29
    $region28: #{tpu_custom_call.1} parent=1 // pred_region
      %58 = dma.done [#allocation6], 512
    $region29: #{tpu_custom_call.1} parent=1 // pred_fallthru
      _
    // Predicated region
    $region30: #{tpu_custom_call.1} parent=1 // pred_check
      _
    $region31: #{tpu_custom_call.1} parent=1 // pred_check_branch
      %60 = sbr.rel (0) target = $region33
    $region32: #{tpu_custom_call.1} parent=1 // pred_region
      %61 = dma.done [#allocation6], 512
    $region33: #{tpu_custom_call.1} parent=1 // pred_fallthru
      _
    %v62 = vld [vmem:[#allocation2] sm:$0xff]
    %v63 = vld [vmem:[#allocation2 + $0x8] sm:$0xff]
    %v64 = vld [vmem:[#allocation2 + $0x10] sm:$0xff]
    %v65 = vld [vmem:[#allocation2 + $0x18] sm:$0xff]
    %v66 = vld [vmem:[#allocation5] sm:$0xff]
    %v67 = vld [vmem:[#allocation5 + $0x8] sm:$0xff]
    %v68 = vld [vmem:[#allocation5 + $0x10] sm:$0xff]
    %v69 = vld [vmem:[#allocation5 + $0x18] sm:$0xff]
    %v70 = vadd.f32 %v62, %v66
    %v71 = vadd.f32 %v63, %v67
    %v72 = vadd.f32 %v64, %v68
    %v73 = vadd.f32 %v65, %v69
    %v74 = vld [vmem:[#allocation7] sm:$0xff]
    %v75 = vld [vmem:[#allocation7 + $0x8] sm:$0xff]
    %v76 = vld [vmem:[#allocation7 + $0x10] sm:$0xff]
    %v77 = vld [vmem:[#allocation7 + $0x18] sm:$0xff]
    %v78 = vadd.f32 %v70, %v74
    %v79 = vadd.f32 %v71, %v75
    %v80 = vadd.f32 %v72, %v76
    %v81 = vadd.f32 %v73, %v77
    %82 = vadd.xlane.f32.xlu0 %v78
    %v83 = vpop.xlane.xlu0 %82
    %84 = vadd.xlane.f32.xlu0 %v79
    %v85 = vpop.xlane.xlu0 %84
    %86 = vadd.xlane.f32.xlu0 %v80
    %v87 = vpop.xlane.xlu0 %86
    %88 = vadd.xlane.f32.xlu0 %v81
    %v89 = vpop.xlane.xlu0 %88
    %v90 = vrcp.pop 128.0
    %v91 = vmul.f32 %v83, %v90
    %v92 = vmul.f32 %v85, %v90
    %v93 = vmul.f32 %v87, %v90
    %v94 = vmul.f32 %v89, %v90
    %v95 = vsub.f32 %v78, %v91
    %v96 = vsub.f32 %v79, %v92
    %v97 = vsub.f32 %v80, %v93
    %v98 = vsub.f32 %v81, %v94
    %v99 = vmul.f32 %v95, %v95
    %v100 = vmul.f32 %v96, %v96
    %v101 = vmul.f32 %v97, %v97
    %v102 = vmul.f32 %v98, %v98
    %103 = vadd.xlane.f32.xlu0 %v99
    %v104 = vpop.xlane.xlu0 %103
    %105 = vadd.xlane.f32.xlu0 %v100
    %v106 = vpop.xlane.xlu0 %105
    %107 = vadd.xlane.f32.xlu0 %v101
    %v108 = vpop.xlane.xlu0 %107
    %109 = vadd.xlane.f32.xlu0 %v102
    %v110 = vpop.xlane.xlu0 %109
    %v111 = vmul.f32 %v104, %v90
    %v112 = vmul.f32 %v106, %v90
    %v113 = vmul.f32 %v108, %v90
    %v114 = vmul.f32 %v110, %v90
    %v115 = vadd.f32 %v111, 1e-05
    %v116 = vadd.f32 %v112, 1e-05
    %v117 = vadd.f32 %v113, 1e-05
    %v118 = vadd.f32 %v114, 1e-05
    %v119 = vrsqrt.pop %v115
    %v120 = vrsqrt.pop %v116
    %v121 = vrsqrt.pop %v117
    %v122 = vrsqrt.pop %v118
    %v123 = vmul.f32 %v95, %v119
    %v124 = vmul.f32 %v96, %v120
    %v125 = vmul.f32 %v97, %v121
    %v126 = vmul.f32 %v98, %v122
    %v127 = vld [vmem:[%s3] sm:$0x1]
    %v129 = vlaneseq
    %v130 = vshrl.u32 %v129, 7
    %v131 = vsub.s32 0, %v130
    %v132 = vrot.slane %v127, %v131
    %v134 = vmul.f32 %v123, %v132
    %v135 = vmul.f32 %v124, %v132
    %v136 = vmul.f32 %v125, %v132
    %v137 = vmul.f32 %v126, %v132
    %v138 = vld [vmem:[%s4] sm:$0x1]
    %v140 = vlaneseq
    %v141 = vshrl.u32 %v140, 7
    %v142 = vsub.s32 0, %v141
    %v143 = vrot.slane %v138, %v142
    %v145 = vadd.f32 %v134, %v143
    %v146 = vadd.f32 %v135, %v143
    %v147 = vadd.f32 %v136, %v143
    %v148 = vadd.f32 %v137, %v143
    %149 = vst [vmem:[#allocation8] sm:$0xff] %v145
    %150 = vst [vmem:[#allocation8 + $0x8] sm:$0xff] %v146
    %151 = vst [vmem:[#allocation8 + $0x10] sm:$0xff] %v147
    %152 = vst [vmem:[#allocation8 + $0x18] sm:$0xff] %v148
    // Predicated region
    $region34: #{tpu_custom_call.1} parent=1 // pred_check
      _
    $region35: #{tpu_custom_call.1} parent=1 // pred_check_branch
      %154 = sbr.rel (0) target = $region37
    $region36: #{tpu_custom_call.1} parent=1 // pred_region
      %s156 = ssub.s32 512, 512
      %157 = vsyncadd [#allocation4], %s156
      %s158 = sshll.u32 [#allocation8], 4
      %s159 = int_to_ptr.vmem [resolvable:$true] %s158
      %164 = dma.vmem_to_hbm [thread:$0]  %s159, 512, %s5, [#allocation4], 128, 128, 8
    $region37: #{tpu_custom_call.1} parent=1 // pred_fallthru
      _
    // Predicated region
    $region38: #{tpu_custom_call.1} parent=1 // pred_check
      _
    $region39: #{tpu_custom_call.1} parent=1 // pred_check_branch
      %166 = sbr.rel (0) target = $region41
    $region40: #{tpu_custom_call.1} parent=1 // pred_region
      %167 = dma.done [#allocation4], 512
    $region41: #{tpu_custom_call.1} parent=1 // pred_fallthru
      _
    %168 = vsyncpa [#allocation3], 1
    %169 = vsyncpa [#allocation6], 1
    %170 = vsyncpa [#allocation4], 1

</llo_original>
